<compile_context>
chip_gen: v7x
topology: tpu7x:2x2x1
jax: 0.10.0
libtpu: 0.0.40
codegen_flags: <defaults>
</compile_context>

<pallas_src>
import functools

import jax
import jax.numpy as jnp
from jax import lax
from jax.experimental import pallas as pl
from jax.experimental.pallas import tpu as pltpu


_SMALL_C = 32        # at/below: pre-transpose in wrapper (avoid lane-padding waste)
_LARGE_C = 128       # at/above: slice-before-transpose (cut XLU lane-shuffle work)
_UNROLL_LIMIT = 64   # above this many patches, use fori_loop instead of unrolling


def _patchify_kernel_transpose_first(x_ref, o_ref, *, seq_start, patch_length,
                                     patch_stride, num_patches, pre_transposed):
    """Small/medium C path.

    x_ref: (TB, C, S) if pre_transposed else (TB, S, C)
    o_ref: (TB, C, P*L) lane-dense output block.
    Each patch window is written directly into its lane slice of o_ref — no
    full-size concat temporary.
    """
    if pre_transposed:
        xt = x_ref[...]                                  # (TB, C, S)
    else:
        xt = jnp.transpose(x_ref[...], (0, 2, 1))        # one transpose per block
    # TODO(synk): on v5e (single vst slot), verify the store slot in the bundle
    # dump; if saturated, switch back to a concat-in-vregs + single dense store.
    if num_patches <= _UNROLL_LIMIT:
        for p in range(num_patches):
            s = seq_start + p * patch_stride
            o_ref[:, :, p * patch_length:(p + 1) * patch_length] = xt[:, :, s:s + patch_length]
    else:
        def body(p, carry):
            s = seq_start + p * patch_stride
            piece = lax.dynamic_slice_in_dim(xt, s, patch_length, axis=2)
            o_ref[:, :, pl.ds(p * patch_length, patch_length)] = piece
            return carry
        lax.fori_loop(0, num_patches, body, 0)


def _patchify_kernel_slice_first(x_ref, o_ref, stage_ref, *, seq_start, patch_length,
                                 patch_stride, num_patches):
    """Large-C path.

    x_ref:     (TB, S, C)
    stage_ref: (TB, P*L, C) VMEM scratch — patches gathered as cheap sublane slices.
    o_ref:     (TB, C, P*L) — ONE transpose of the staging buffer.
    """
    if num_patches <= _UNROLL_LIMIT:
        for p in range(num_patches):
            s = seq_start + p * patch_stride
            stage_ref[:, p * patch_length:(p + 1) * patch_length, :] = x_ref[:, s:s + patch_length, :]
    else:
        def body(p, carry):
            s = seq_start + p * patch_stride
            stage_ref[:, pl.ds(p * patch_length, patch_length), :] = x_ref[:, pl.ds(s, patch_length), :]
            return carry
        lax.fori_loop(0, num_patches, body, 0)
    o_ref[...] = jnp.transpose(stage_ref[...], (0, 2, 1))


def _padded_tile_bytes(shape, itemsize):
    """VMEM bytes of one block after (sublane, lane) layout padding."""
    *lead, sub, lane = shape
    sub_mult = max(8, 8 * (4 // max(1, itemsize)))   # 8 f32 / 16 bf16 / 32 int8
    sub_p = -(-sub // sub_mult) * sub_mult
    lane_p = -(-lane // 128) * 128
    n = 1
    for d in lead:
        n *= int(d)
    return n * sub_p * lane_p * itemsize


def _vmem_capacity_bytes():
    try:
        return int(pltpu.get_tpu_info().vmem_capacity_bytes)
    except Exception:
        return 64 << 20   # conservative fallback = v7x per-TensorCore VMEM


def patchify(time_values, patch_length, patch_stride, sequence_length):
    """Pallas implementation of Patchify.forward.

    time_values: (B, S, C) array, S must equal sequence_length.
    returns:     (B, C, num_patches, patch_length) array (same dtype, bit-exact copy).
    """
    B, S, C = time_values.shape
    if S != sequence_length:
        raise ValueError(
            f"Input sequence length ({S}) doesn't match model configuration ({sequence_length})."
        )
    if sequence_length < patch_length:
        raise ValueError(
            f"Sequence length ({sequence_length}) has to be greater than the patch length ({patch_length})"
        )
    num_patches = (max(sequence_length, patch_length) - patch_length) // patch_stride + 1
    new_sequence_length = patch_length + patch_stride * (num_patches - 1)
    seq_start = sequence_length - new_sequence_length
    pl_total = num_patches * patch_length

    # Fast path: gap-free non-overlapping patches are an exact transpose+reshape.
    if patch_stride == patch_length:
        x = time_values[:, seq_start:, :]                          # (B, P*L, C)
        return jnp.transpose(x, (0, 2, 1)).reshape(B, C, num_patches, patch_length)

    dtype = time_values.dtype
    itemsize = jnp.dtype(dtype).itemsize

    large_c = C >= _LARGE_C
    pre_transposed = (not large_c) and (C <= _SMALL_C)

    if pre_transposed:
        # XLA transpose at roofline; kernel then needs zero in-kernel transposes
        # and the input block keeps its lanes dense (S on the lane axis).
        x_in = jnp.transpose(time_values, (0, 2, 1))               # (B, C, S)
        in_block_tail = (C, S)
    else:
        x_in = time_values
        in_block_tail = (S, C)

    # ---- batch-tile selection from the real (padded) per-step VMEM footprint ----
    in_b = _padded_tile_bytes((1,) + in_block_tail, itemsize)
    out_b = _padded_tile_bytes((1, C, pl_total), itemsize)
    stage_b = _padded_tile_bytes((1, pl_total, C), itemsize) if large_c else 0
    # 2x in + 2x out (double buffering) + staging scratch + transpose temp.
    per_batch = 2 * in_b + 2 * out_b + stage_b + out_b

    cap = _vmem_capacity_bytes()
    # ~20 MiB/step fits every generation's scoped headroom (v7x: 64 MiB physical);
    # allow larger steps on 128 MiB parts (v5e/v6e) to reach the HBM roofline knee.
    step_budget = (40 << 20) if cap >= (96 << 20) else (20 << 20)
    tb = max(1, step_budget // per_batch)
    # Keep >=4 grid steps (pipeline steady state + megacore batch sharding on
    # v7x) when the batch allows it, otherwise >=2.
    # TODO(synk): also bias toward an even step count on 2-TensorCore parts.
    if B >= 8:
        tb = min(tb, B // 4)
    elif B >= 2:
        tb = min(tb, max(1, B // 2))
    tb = max(1, min(tb, B))
    grid_steps = pl.cdiv(B, tb)          # ragged last block is fine: op is per-batch-row

    vmem_limit = int(max(32 << 20, min(cap * 3 // 4, tb * per_batch + (8 << 20))))

    if large_c:
        kernel = functools.partial(
            _patchify_kernel_slice_first,
            seq_start=seq_start, patch_length=patch_length,
            patch_stride=patch_stride, num_patches=num_patches)
        scratch = [pltpu.VMEM((tb, pl_total, C), dtype)]
    else:
        kernel = functools.partial(
            _patchify_kernel_transpose_first,
            seq_start=seq_start, patch_length=patch_length,
            patch_stride=patch_stride, num_patches=num_patches,
            pre_transposed=pre_transposed)
        scratch = []

    out_flat = pl.pallas_call(
        kernel,
        out_shape=jax.ShapeDtypeStruct((B, C, pl_total), dtype),
        grid_spec=pltpu.PrefetchScalarGridSpec(
            num_scalar_prefetch=0,
            grid=(grid_steps,),
            in_specs=[pl.BlockSpec((tb,) + in_block_tail, lambda b: (b, 0, 0))],
            out_specs=pl.BlockSpec((tb, C, pl_total), lambda b: (b, 0, 0)),
            scratch_shapes=scratch,
        ),
        compiler_params=pltpu.CompilerParams(
            dimension_semantics=("parallel",),
            vmem_limit_bytes=vmem_limit,
        ),
        cost_estimate=pl.CostEstimate(
            flops=0,
            transcendentals=0,
            bytes_accessed=B * (S * C + C * pl_total) * itemsize,
        ),
    )(x_in)

    # Free metadata reshape to the PyTorch output layout.
    return out_flat.reshape(B, C, num_patches, patch_length)


def _patchify_reference(time_values, patch_length, patch_stride, sequence_length):
    """Pure-JAX reference mirroring the PyTorch forward (unfold + transpose)."""
    num_patches = (max(sequence_length, patch_length) - patch_length) // patch_stride + 1
    new_sequence_length = patch_length + patch_stride * (num_patches - 1)
    seq_start = sequence_length - new_sequence_length
    x = time_values[:, seq_start:, :]                               # (B, S', C)
    patches = [
        x[:, p * patch_stride:p * patch_stride + patch_length, :]   # (B, L, C)
        for p in range(num_patches)
    ]
    stacked = jnp.stack(patches, axis=1)                            # (B, P, L, C)
    return jnp.transpose(stacked, (0, 3, 1, 2))                     # (B, C, P, L)


if __name__ == "__main__":
    key = jax.random.PRNGKey(0)

    def check(B, S, C, L, stride, k):
        x = jax.random.normal(k, (B, S, C), dtype=jnp.float32)
        out = jax.block_until_ready(patchify(x, L, stride, S))
        ref = _patchify_reference(x, L, stride, S)
        P = (max(S, L) - L) // stride + 1
        assert out.shape == (B, C, P, L), (out.shape, (B, C, P, L))
        assert out.dtype == x.dtype
        # Pure data movement -> must be bit-exact.
        assert bool(jnp.array_equal(out, ref)), (
            f"Pallas patchify mismatch B={B} S={S} C={C} L={L} stride={stride}")

    k0, k1, k2, k3 = jax.random.split(key, 4)
    # Module config: sequence_length=16, patch_length=6, patch_stride=4 -> P=3, start=2.
    # 1) small-C path (wrapper pre-transpose + transpose-free lane gather), overlapping.
    check(2, 16, 4, 6, 4, k0)
    # 2) medium-C path (in-kernel transpose, direct per-patch stores), ragged batch
    #    tiling (B=5 -> tb=2 -> 3 grid steps with a partial last block).
    check(5, 16, 64, 6, 4, k1)
    # 3) large-C path (sublane slices into VMEM staging scratch, single transpose).
    check(2, 16, 160, 6, 4, k2)
    # 4) non-overlapping fast path (pure XLA transpose + reshape).
    check(2, 16, 4, 4, 4, k3)

    print("KERNEL_OK")
</pallas_src>

<mosaic_0001>
module attributes {stable_mosaic.version = 11 : i64} {
  func.func @_patchify_kernel_transpose_first(%arg0: i32, %arg1: memref<1x4x16xf32, #tpu.memory_space<vmem>>, %arg2: memref<1x4x18xf32, #tpu.memory_space<vmem>>) attributes {dimension_semantics = [#tpu.dimension_semantics<parallel>], iteration_bounds = array<i64: 2>, scalar_prefetch = 0 : i64, scratch_operands = 0 : i64, tpu.core_type = #tpu.core_type<tc>, window_params = [{transform_indices = @transform_0, window_bounds = array<i64: 1, 4, 16>}, {transform_indices = @transform_1, window_bounds = array<i64: 1, 4, 18>}]} {
    %c0 = arith.constant 0 : index
    %c0_0 = arith.constant 0 : index
    %c0_1 = arith.constant 0 : index
    %0 = vector.load %arg1[%c0, %c0_0, %c0_1] : memref<1x4x16xf32, #tpu.memory_space<vmem>>, vector<1x4x16xf32>
    %1 = vector.extract_strided_slice %0 {offsets = [0, 0, 2], sizes = [1, 4, 6], strides = [1, 1, 1]} : vector<1x4x16xf32> to vector<1x4x6xf32>
    %c0_2 = arith.constant 0 : index
    %c0_3 = arith.constant 0 : index
    %c0_4 = arith.constant 0 : index
    %2 = vector.load %arg2[%c0_2, %c0_3, %c0_4] : memref<1x4x18xf32, #tpu.memory_space<vmem>>, vector<1x4x6xf32>
    tpu.vector_store %arg2[%c0_2, %c0_3, %c0_4], %1 {strides = array<i32>} : memref<1x4x18xf32, #tpu.memory_space<vmem>>, vector<1x4x6xf32>,
    %3 = vector.extract_strided_slice %0 {offsets = [0, 0, 6], sizes = [1, 4, 6], strides = [1, 1, 1]} : vector<1x4x16xf32> to vector<1x4x6xf32>
    %c0_5 = arith.constant 0 : index
    %c0_6 = arith.constant 0 : index
    %c6 = arith.constant 6 : index
    %4 = vector.load %arg2[%c0_5, %c0_6, %c6] : memref<1x4x18xf32, #tpu.memory_space<vmem>>, vector<1x4x6xf32>
    tpu.vector_store %arg2[%c0_5, %c0_6, %c6], %3 {strides = array<i32>} : memref<1x4x18xf32, #tpu.memory_space<vmem>>, vector<1x4x6xf32>,
    %5 = vector.extract_strided_slice %0 {offsets = [0, 0, 10], sizes = [1, 4, 6], strides = [1, 1, 1]} : vector<1x4x16xf32> to vector<1x4x6xf32>
    %c0_7 = arith.constant 0 : index
    %c0_8 = arith.constant 0 : index
    %c12 = arith.constant 12 : index
    %6 = vector.load %arg2[%c0_7, %c0_8, %c12] : memref<1x4x18xf32, #tpu.memory_space<vmem>>, vector<1x4x6xf32>
    tpu.vector_store %arg2[%c0_7, %c0_8, %c12], %5 {strides = array<i32>} : memref<1x4x18xf32, #tpu.memory_space<vmem>>, vector<1x4x6xf32>,
    return
  }
  func.func @transform_0(%arg0: i32) -> (i32, i32, i32) {
    %c0_i32 = arith.constant 0 : i32
    %c0_i32_0 = arith.constant 0 : i32
    %c0_i32_1 = arith.constant 0 : i32
    return %arg0, %c0_i32, %c0_i32_0 : i32, i32, i32
  }
  func.func @transform_1(%arg0: i32) -> (i32, i32, i32) {
    %c0_i32 = arith.constant 0 : i32
    %c0_i32_0 = arith.constant 0 : i32
    %c0_i32_1 = arith.constant 0 : i32
    return %arg0, %c0_i32, %c0_i32_0 : i32, i32, i32
  }
}

</mosaic_0001>

<llo_original>
// kernel: tpu_custom_call.1
$region0: #{tpu_custom_call.1}
  #allocation0 [shape = 'u32[]', space=smem, size = 0x4, offset = 0x4, fixed_abs, tag = 'smem constant byte address 0x4 - core index']
  #allocation1 [shape = 'u32[144,128]{1,0:T(1,128)}', space=vmem, size = 0x12000, scoped, tag = 'internal scratch']
  %s0 = inlined_call_operand.hbm [shape: f32[2,4,16], index: 0, kind: input, shape index: {}]
  %s1 = inlined_call_operand.hbm [shape: f32[2,4,18], index: 1, kind: output, shape index: {}]
  %s2 = sld [smem:[#allocation0]]
  $region41: #{tpu_custom_call.1} parent=0
    _
  %s4 = ssub.s32 1, %s2
  %s5 = scalar_select 0, %s4, %s2
  $region1: #{tpu_custom_call.1} parent=0
    #allocation2 [shape = 'u8[4096]{0}', space=vmem, size = 0x1000, scoped, tag = 'input window, operand 0']
    #allocation3 [shape = 's32[2]{0}', space=sflag, size = 0x8, scoped, tag = 'scoped memory for tpu_custom_call.1']
    #allocation4 [shape = 's32[2]{0}', space=sflag, size = 0x8, scoped, tag = 'scoped memory for tpu_custom_call.1']
    #allocation5 [shape = 'u8[4096]{0}', space=vmem, size = 0x1000, scoped, tag = 'output window, operand 0']
    %6 = vsyncpa [#allocation3], 0
    %s7 = scalar_lea.sflag [#allocation3], 1
    %8 = vsyncpa %s7, 0
    %9 = vsyncpa [#allocation4], 0
    %s10 = scalar_lea.sflag [#allocation4], 1
    %11 = vsyncpa %s10, 0
    loop: start=0, step=1, limit=4
    $region2: #{tpu_custom_call.1} parent=1 // loop_pre_header
      _
    $region3: #{tpu_custom_call.1} parent=1 // loop_header
      %s13 = sphi 0, %s17
      %p14 = scmp.ge.s32.totalorder %s13, 4
      %s23 = sphi 0, %s25
      %s26 = sphi 0, %s23
      %s27 = sphi 0, %s26
      %s43 = sphi 0, %s27
      %s49 = sphi 0, %s51
      %s52 = sphi 0, %s49
      %s53 = sphi 0, %s52
      %s69 = sphi 0, %s53
    $region4: #{tpu_custom_call.1} parent=1 // loop_header_branch
      %16 = sbr.rel (%p14) target = $region8
    $region5: #{tpu_custom_call.1} parent=1 // loop_body
      %s18 = ssub.s32 %s13, 1
      %s19 = ssub.s32 %s13, 2
      %s20 = sadd.s32 %s13, 1
      %s21 = ssub.s32 %s13, %s20
      %p22 = scmp.eq.s32.totalorder %s21, 0
      %s24 = sadd.s32 %s23, 1
      %s25 = scalar_select %p22, %s23, %s24
      %p28 = pneg %p22
      %p29 = scmp.eq.s32.totalorder %s13, 1
      %p30 = por %p28, %p29
      %p31 = scmp.ne.s32.totalorder %s23, %s26
      %p32 = scmp.eq.s32.totalorder %s13, 0
      %p33 = por %p31, %p32
      %p34 = scmp.ne.s32.totalorder %s23, %s26
      %p35 = scmp.eq.s32.totalorder %s18, 1
      %p36 = por %p34, %p35
      %p37 = scmp.ne.s32.totalorder %s26, %s27
      %p38 = scmp.eq.s32.totalorder %s18, 0
      %p39 = por %p37, %p38
      %p40 = scmp.ne.s32.totalorder %s26, %s27
      %p41 = scmp.eq.s32.totalorder %s19, 1
      %p42 = por %p40, %p41
      %p44 = scmp.ne.s32.totalorder %s27, %s43
      %p45 = scmp.eq.s32.totalorder %s19, 0
      %p46 = por %p44, %p45
      %s47 = ssub.s32 %s13, %s20
      %p48 = scmp.eq.s32.totalorder %s47, 0
      %s50 = sadd.s32 %s49, 1
      %s51 = scalar_select %p48, %s49, %s50
      %p54 = pneg %p48
      %p55 = scmp.eq.s32.totalorder %s13, 1
      %p56 = por %p54, %p55
      %p57 = scmp.ne.s32.totalorder %s49, %s52
      %p58 = scmp.eq.s32.totalorder %s13, 0
      %p59 = por %p57, %p58
      %p60 = scmp.ne.s32.totalorder %s49, %s52
      %p61 = scmp.eq.s32.totalorder %s18, 1
      %p62 = por %p60, %p61
      %p63 = scmp.ne.s32.totalorder %s52, %s53
      %p64 = scmp.eq.s32.totalorder %s18, 0
      %p65 = por %p63, %p64
      %p66 = scmp.ne.s32.totalorder %s52, %s53
      %p67 = scmp.eq.s32.totalorder %s19, 1
      %p68 = por %p66, %p67
      %p70 = scmp.ne.s32.totalorder %s53, %s69
      %p71 = scmp.eq.s32.totalorder %s19, 0
      %p72 = por %p70, %p71
      %p73 = scmp.le.s32.totalorder 1, %s13
      %p74 = scmp.lt.s32.totalorder %s13, 3
      %p75 = pnand %p73, %p74
      %p76 = pneg %p75
      // Predicated region
      $region9: #{tpu_custom_call.1} parent=5 // pred_check
        _
      $region10: #{tpu_custom_call.1} parent=5 // pred_check_branch
        %78 = sbr.rel (%p75) target = $region12
      $region11: #{tpu_custom_call.1} parent=5 // pred_region
        %s79 = ssub.s32 %s13, 1
      $region12: #{tpu_custom_call.1} parent=5 // pred_fallthru
        _
      %p80 = scmp.lt.s32.totalorder %s13, 2
      // Predicated region
      $region13: #{tpu_custom_call.1} parent=5 // pred_check
        %p81 = pneg %p80
      $region14: #{tpu_custom_call.1} parent=5 // pred_check_branch
        %83 = sbr.rel (%p81) target = $region16
      $region15: #{tpu_custom_call.1} parent=5 // pred_region
        // Predicated region
        $region17: #{tpu_custom_call.1} parent=15 // pred_check
          %p84 = pneg %p33
        $region18: #{tpu_custom_call.1} parent=15 // pred_check_branch
          %86 = sbr.rel (%p84) target = $region20
        $region19: #{tpu_custom_call.1} parent=15 // pred_region
          %s87 = sand.u32 %s23, 1
          %s88 = scalar_lea.sflag [#allocation3], %s87
          %s89 = sand.u32 %s23, 1
          %s90 = smul.addr %s89, 4
          %s91 = scalar_lea.vmem [#allocation2], %s90
          %s93 = ssub.s32 64, 64
          %94 = vsyncadd %s88, %s93
          %s95 = smul.addr %s13, 64
          %s96 = scalar_lea.hbm %s0, %s95
          %s98 = sshll.u32 %s91, 4
          %s99 = int_to_ptr.vmem [resolvable:$true] %s98
          %101 = dma.hbm_to_vmem [thread:$0]  %s96, 64, %s99, %s88
        $region20: #{tpu_custom_call.1} parent=15 // pred_fallthru
          _
      $region16: #{tpu_custom_call.1} parent=5 // pred_fallthru
        _
      %p102 = scmp.le.s32.totalorder 1, %s13
      %p103 = scmp.lt.s32.totalorder %s13, 3
      %p104 = pnand %p102, %p103
      %p105 = pneg %p104
      // Predicated region
      $region21: #{tpu_custom_call.1} parent=5 // pred_check
        _
      $region22: #{tpu_custom_call.1} parent=5 // pred_check_branch
        %107 = sbr.rel (%p104) target = $region24
      $region23: #{tpu_custom_call.1} parent=5 // pred_region
        %s108 = ssub.s32 %s13, 1
        %s109 = sand.u32 %s26, 1
        %s110 = scalar_lea.sflag [#allocation3], %s109
        %s111 = sand.u32 %s26, 1
        %s112 = smul.addr %s111, 4
        %s113 = scalar_lea.vmem [#allocation2], %s112
        // Predicated region
        $region25: #{tpu_custom_call.1} parent=23 // pred_check
          %p114 = pneg %p39
        $region26: #{tpu_custom_call.1} parent=23 // pred_check_branch
          %116 = sbr.rel (%p114) target = $region28
        $region27: #{tpu_custom_call.1} parent=23 // pred_region
          %117 = dma.done %s110, 64
        $region28: #{tpu_custom_call.1} parent=23 // pred_fallthru
          _
        %s118 = sand.u32 %s26, 1
        %s119 = scalar_lea.sflag [#allocation3], %s118
        %s120 = sand.u32 %s26, 1
        %s121 = smul.addr %s120, 4
        %s122 = scalar_lea.vmem [#allocation2], %s121
        %p123 = pneg %p39
        %p124 = pneg %p36
        %p125 = pneg %p65
        %p126 = pneg %p62
        %s127 = sand.u32 %s52, 1
        %s128 = scalar_lea.sflag [#allocation4], %s127
        %s129 = sand.u32 %s52, 1
        %s130 = smul.addr %s129, 4
        %s131 = scalar_lea.vmem [#allocation5], %s130
        %v132 = vld [vmem:[%s113] sm:$0xf]
        %134 = vrot.lane.b32.xlu0 %v132, 126
        %v135 = vpop.permute.xlu0 %134
        %vm137 = vcmask 44032
        %138 = vst.msk [vmem:[%s131] sm:$0xf] %vm137, %v135
        %vm139 = vcmask 93232
        %140 = vst.msk [vmem:[%s131] sm:$0xf] %vm139, %v132
        %141 = vrot.lane.b32.xlu0 %v132, 2
        %v142 = vpop.permute.xlu0 %141
        %vm144 = vcmask 142432
        %145 = vst.msk [vmem:[%s131] sm:$0xf] %vm144, %v142
        %s146 = sand.u32 %s52, 1
        %s147 = scalar_lea.sflag [#allocation4], %s146
        %s148 = sand.u32 %s52, 1
        %s149 = smul.addr %s148, 4
        %s150 = scalar_lea.vmem [#allocation5], %s149
        // Predicated region
        $region29: #{tpu_custom_call.1} parent=23 // pred_check
          %p151 = pneg %p62
        $region30: #{tpu_custom_call.1} parent=23 // pred_check_branch
          %153 = sbr.rel (%p151) target = $region32
        $region31: #{tpu_custom_call.1} parent=23 // pred_region
          %s155 = ssub.s32 64, 64
          %156 = vsyncadd %s147, %s155
          %s157 = smul.addr %s18, 64
          %s158 = scalar_lea.hbm %s1, %s157
          %s160 = sshll.u32 %s150, 4
          %s161 = int_to_ptr.vmem [resolvable:$true] %s160
          %163 = dma.vmem_to_hbm [thread:$0]  %s161, 64, %s158, %s147
        $region32: #{tpu_custom_call.1} parent=23 // pred_fallthru
          _
      $region24: #{tpu_custom_call.1} parent=5 // pred_fallthru
        _
      %p164 = scmp.le.s32.totalorder 2, %s13
      // Predicated region
      $region33: #{tpu_custom_call.1} parent=5 // pred_check
        %p165 = pneg %p164
      $region34: #{tpu_custom_call.1} parent=5 // pred_check_branch
        %167 = sbr.rel (%p165) target = $region36
      $region35: #{tpu_custom_call.1} parent=5 // pred_region
        %s168 = ssub.s32 %s13, 2
        // Predicated region
        $region37: #{tpu_custom_call.1} parent=35 // pred_check
          %p169 = pneg %p68
        $region38: #{tpu_custom_call.1} parent=35 // pred_check_branch
          %171 = sbr.rel (%p169) target = $region40
        $region39: #{tpu_custom_call.1} parent=35 // pred_region
          %s172 = sand.u32 %s53, 1
          %s173 = scalar_lea.sflag [#allocation4], %s172
          %s174 = sand.u32 %s53, 1
          %s175 = smul.addr %s174, 4
          %s176 = scalar_lea.vmem [#allocation5], %s175
          %177 = dma.done %s173, 64
        $region40: #{tpu_custom_call.1} parent=35 // pred_fallthru
          _
      $region36: #{tpu_custom_call.1} parent=5 // pred_fallthru
        _
    $region6: #{tpu_custom_call.1} parent=1 // loop_footer
      %s17 = sadd.s32 1, %s13
    $region7: #{tpu_custom_call.1} parent=1 // loop_footer_branch
      %12 = sbr.rel target = $region3
    $region8: #{tpu_custom_call.1} parent=1 // loop_exit
      _
    %178 = vsyncpa [#allocation3], 1
    %s179 = scalar_lea.sflag [#allocation3], 1
    %180 = vsyncpa %s179, 1
    %181 = vsyncpa [#allocation4], 1
    %s182 = scalar_lea.sflag [#allocation4], 1
    %183 = vsyncpa %s182, 1

</llo_original>
